<compile_context>
chip_gen: v7x
topology: tpu7x:2x2x1
jax: 0.10.0
libtpu: 0.0.40
codegen_flags: <defaults>
</compile_context>

<pallas_src>
import functools
import math

import jax
import jax.numpy as jnp
from jax.experimental import pallas as pl
from jax.experimental.pallas import tpu as pltpu


# ----------------------------------------------------------------------------
# Parameter ("buffer") construction — deterministic, mirrors PyTorch __init__.
# ----------------------------------------------------------------------------
def make_positional_table(d: int, max_len: int = 600) -> jnp.ndarray:
    """Returns pe of shape (max_len, 1, d), float32 — same as the registered buffer.

    Note: the classic PyTorch recipe requires even d (it errors for odd d), so we
    assert that here instead of silently truncating.
    """
    assert d % 2 == 0, "PositionEncode requires an even hidden size d"
    position = jnp.arange(0, max_len, dtype=jnp.float32)[:, None]               # (max_len, 1)
    div_term = jnp.exp(jnp.arange(0, d, 2, dtype=jnp.float32)
                       * (-math.log(10000.0) / d))                              # (d//2,)
    angles = position * div_term                                                # (max_len, d//2)
    pe = jnp.zeros((max_len, d), dtype=jnp.float32)
    pe = pe.at[:, 0::2].set(jnp.sin(angles))
    pe = pe.at[:, 1::2].set(jnp.cos(angles))
    return pe[:, None, :]                                                       # (max_len, 1, d)


# ----------------------------------------------------------------------------
# Pallas kernels (operate on the lane-dense 2D view: x2 = x.reshape(S, B*D))
# ----------------------------------------------------------------------------
def _broadcast_pe(pe_block, batch: int):
    # pe_block: (TS, D) -> (TS, B*D), i.e. tiled[s, b*D + d] = pe[s, d].
    # Lane-dim concat of the *small* pe tile; pure filler work under the DMA.
    if batch == 1:
        return pe_block
    return jnp.concatenate([pe_block] * batch, axis=-1)


def _posenc_eval_kernel(x_ref, pe_ref, o_ref, *, batch: int):
    # x_ref: (TS, B*D), pe_ref: (TS, D) — broadcast add over batch, lane-dense store.
    o_ref[...] = (x_ref[...] + _broadcast_pe(pe_ref[...], batch)).astype(o_ref.dtype)


def _posenc_train_kernel(seed_ref, x_ref, pe_ref, o_ref, *, batch: int, rate: float):
    # Seed the hardware PRNG with (base_seed, tile_index) so streams never alias
    # across tiles even for consecutive base seeds.
    pltpu.prng_seed(seed_ref[0], pl.program_id(0))
    y = x_ref[...] + _broadcast_pe(pe_ref[...], batch)
    bits = pltpu.prng_random_bits(y.shape)
    if bits.dtype != jnp.uint32:
        bits = pltpu.bitcast(bits, jnp.uint32)           # pure reinterpret, no convert
    threshold = jnp.uint32(min(int(rate * (1 << 32)), (1 << 32) - 1))
    keep = bits >= threshold                             # P(keep) = 1 - rate, integer domain
    scale = jnp.float32(1.0 / (1.0 - rate))
    o_ref[...] = jnp.where(keep, y * scale, jnp.zeros_like(y)).astype(o_ref.dtype)


# ----------------------------------------------------------------------------
# Tiling heuristic: ~1 MiB x-blocks (fits v5e 16 MiB scoped / v7x 32 MiB scoped
# with double-buffered x + out + pe), rows a multiple of 8 that divides S.
# ----------------------------------------------------------------------------
def _pick_seq_tile(S: int, row_bytes: int, target_bytes: int = 1 << 20) -> int:
    if S * row_bytes <= 2 * target_bytes or S % 8 != 0:
        return S
    max_rows = max(8, target_bytes // row_bytes)
    t = min(S, (max_rows // 8) * 8)
    while t >= 8:
        if S % t == 0:
            return t
        t -= 8
    return S


# ----------------------------------------------------------------------------
# Wrapper
# ----------------------------------------------------------------------------
def position_encode(x: jnp.ndarray,
                    pe: jnp.ndarray,
                    *,
                    dropout: float = 0.1,
                    train: bool = False,
                    seed: int = 0,
                    seq_tile: int | None = None) -> jnp.ndarray:
    """x: (S, B, D);  pe: (max_len, 1, D).  Returns dropout(x + pe[:S])."""
    S, B, D = x.shape
    max_len = pe.shape[0]
    assert pe.shape == (max_len, 1, D) and max_len >= S

    # Lane-dense 2D views — free contiguous reshapes done by XLA outside the kernel.
    x2 = x.reshape(S, B * D)
    pe2 = pe.reshape(max_len, D)          # full table; index_map picks the rows

    row_bytes = B * D * x.dtype.itemsize
    if seq_tile is None:
        seq_tile = _pick_seq_tile(S, row_bytes)
    assert S % seq_tile == 0 and (seq_tile % 8 == 0 or seq_tile == S)
    if seq_tile % 8 != 0:
        # Rare fallback (S not a multiple of 8, single block): make the pe block span
        # the full array so the (8, 128) block-shape constraint is satisfied.
        pe2 = pe2[:S]

    grid = (S // seq_tile,)
    out_shape = jax.ShapeDtypeStruct((S, B * D), x.dtype)
    cparams = pltpu.CompilerParams(dimension_semantics=("parallel",))
    cost = pl.CostEstimate(
        flops=S * B * D,
        transcendentals=0,
        bytes_accessed=2 * S * B * D * x.dtype.itemsize + S * D * pe2.dtype.itemsize,
    )

    if train and dropout > 0.0:
        seed_arr = jnp.array([seed], dtype=jnp.int32)
        kernel = functools.partial(_posenc_train_kernel, batch=B, rate=float(dropout))
        out2 = pl.pallas_call(
            kernel,
            out_shape=out_shape,
            grid_spec=pltpu.PrefetchScalarGridSpec(
                num_scalar_prefetch=1,
                grid=grid,
                in_specs=[pl.BlockSpec((seq_tile, B * D), lambda i, s: (i, 0)),
                          pl.BlockSpec((seq_tile, D), lambda i, s: (i, 0))],
                out_specs=pl.BlockSpec((seq_tile, B * D), lambda i, s: (i, 0)),
            ),
            compiler_params=cparams,
            cost_estimate=cost,
        )(seed_arr, x2, pe2)
    else:
        # Eval mode: dropout is identity (exact PyTorch .eval() semantics).
        kernel = functools.partial(_posenc_eval_kernel, batch=B)
        out2 = pl.pallas_call(
            kernel,
            out_shape=out_shape,
            grid_spec=pl.GridSpec(
                grid=grid,
                in_specs=[pl.BlockSpec((seq_tile, B * D), lambda i: (i, 0)),
                          pl.BlockSpec((seq_tile, D), lambda i: (i, 0))],
                out_specs=pl.BlockSpec((seq_tile, B * D), lambda i: (i, 0)),
            ),
            compiler_params=cparams,
            cost_estimate=cost,
            # TODO(synk): pass input_output_aliases={0: 0} when the caller donates x
            # (in-place writeback; skipped here because the demo reuses x afterwards).
        )(x2, pe2)

    return out2.reshape(S, B, D)


# ----------------------------------------------------------------------------
# Main
# ----------------------------------------------------------------------------
if __name__ == "__main__":
    MAX_LEN = 600

    # Shapes implied by the module's forward: x is (seq, batch, d).
    S, B, D = 8, 2, 32
    key = jax.random.PRNGKey(0)
    x = jax.random.normal(key, (S, B, D), dtype=jnp.float32)
    pe = make_positional_table(D, MAX_LEN)                       # (600, 1, 32)

    # Eval-mode forward (dropout = identity), matching module.eval().
    out = jax.block_until_ready(position_encode(x, pe, dropout=0.1, train=False))
    ref = x + pe[:S]
    assert out.shape == (S, B, D)
    assert jnp.allclose(out, ref, atol=1e-6), "mismatch vs reference (eval)"

    # A second shape that exercises the multi-tile (grid > 1) pipelined path.
    S2, B2, D2 = 256, 4, 64
    x_big = jax.random.normal(jax.random.PRNGKey(1), (S2, B2, D2), dtype=jnp.float32)
    pe_big = make_positional_table(D2, MAX_LEN)
    out_big = jax.block_until_ready(position_encode(x_big, pe_big, train=False, seq_tile=64))
    assert jnp.allclose(out_big, x_big + pe_big[:S2], atol=1e-6), "mismatch (tiled)"

    # Training/dropout path uses the TPU hardware PRNG; exercise it only on a real TPU
    # backend (pltpu.prng_seed has no CPU/interpret lowering).
    if jax.devices()[0].platform == "tpu":
        out_tr = jax.block_until_ready(
            position_encode(x, pe, dropout=0.1, train=True, seed=123))
        assert out_tr.shape == (S, B, D)
        scaled = ref / (1.0 - 0.1)
        ok = jnp.isclose(out_tr, 0.0) | jnp.isclose(out_tr, scaled, atol=1e-5)
        assert bool(jnp.all(ok)), "dropout output not in {0, (x+pe)/keep_prob}"

    print("KERNEL_OK")
</pallas_src>

<mosaic_0001>
module attributes {stable_mosaic.version = 11 : i64} {
  func.func @_posenc_eval_kernel(%arg0: i32, %arg1: memref<8x64xf32, #tpu.memory_space<vmem>>, %arg2: memref<8x32xf32, #tpu.memory_space<vmem>>, %arg3: memref<8x64xf32, #tpu.memory_space<vmem>>) attributes {dimension_semantics = [#tpu.dimension_semantics<parallel>], iteration_bounds = array<i64: 1>, scalar_prefetch = 0 : i64, scratch_operands = 0 : i64, tpu.core_type = #tpu.core_type<tc>, window_params = [{transform_indices = @transform_0, window_bounds = array<i64: 8, 64>}, {transform_indices = @transform_1, window_bounds = array<i64: 8, 32>}, {transform_indices = @transform_2, window_bounds = array<i64: 8, 64>}]} {
    %c0 = arith.constant 0 : index
    %c0_0 = arith.constant 0 : index
    %0 = vector.load %arg1[%c0, %c0_0] : memref<8x64xf32, #tpu.memory_space<vmem>>, vector<8x64xf32>
    %c0_1 = arith.constant 0 : index
    %c0_2 = arith.constant 0 : index
    %1 = vector.load %arg2[%c0_1, %c0_2] : memref<8x32xf32, #tpu.memory_space<vmem>>, vector<8x32xf32>
    %2 = tpu.concatenate %1, %1 in 1 : vector<8x32xf32>, vector<8x32xf32> -> vector<8x64xf32>
    %3 = arith.addf %0, %2 : vector<8x64xf32>
    %c0_3 = arith.constant 0 : index
    %c0_4 = arith.constant 0 : index
    %4 = vector.load %arg3[%c0_3, %c0_4] : memref<8x64xf32, #tpu.memory_space<vmem>>, vector<8x64xf32>
    tpu.vector_store %arg3[%c0_3, %c0_4], %3 {strides = array<i32>} : memref<8x64xf32, #tpu.memory_space<vmem>>, vector<8x64xf32>,
    return
  }
  func.func @transform_0(%arg0: i32) -> (i32, i32) {
    %c0_i32 = arith.constant 0 : i32
    %c0_i32_0 = arith.constant 0 : i32
    return %arg0, %c0_i32 : i32, i32
  }
  func.func @transform_1(%arg0: i32) -> (i32, i32) {
    %c0_i32 = arith.constant 0 : i32
    %c0_i32_0 = arith.constant 0 : i32
    return %arg0, %c0_i32 : i32, i32
  }
  func.func @transform_2(%arg0: i32) -> (i32, i32) {
    %c0_i32 = arith.constant 0 : i32
    %c0_i32_0 = arith.constant 0 : i32
    return %arg0, %c0_i32 : i32, i32
  }
}

</mosaic_0001>

<llo_original>
// kernel: tpu_custom_call.1
$region0: #{tpu_custom_call.1}
  #allocation0 [shape = 'u32[]', space=smem, size = 0x4, offset = 0x4, fixed_abs, tag = 'smem constant byte address 0x4 - core index']
  #allocation1 [shape = 'u32[144,128]{1,0:T(1,128)}', space=vmem, size = 0x12000, scoped, tag = 'internal scratch']
  %s0 = inlined_call_operand.vmem [shape: f32[8,64], index: 0, kind: input, shape index: {}]
  %s1 = inlined_call_operand.vmem [shape: f32[600,32], index: 1, kind: input, shape index: {}]
  %s2 = inlined_call_operand.hbm [shape: f32[8,64], index: 2, kind: output, shape index: {}]
  %s3 = sld [smem:[#allocation0]]
  $region18: #{tpu_custom_call.1} parent=0
    _
  %s5 = ssub.s32 1, %s3
  %s6 = scalar_select 0, %s5, %s3
  $region1: #{tpu_custom_call.1} parent=0
    #allocation2 [shape = 'u8[4096]{0}', space=vmem, size = 0x1000, scoped, tag = 'output window, operand 0, single buffered']
    #allocation3 [shape = 's32[1]{0}', space=sflag, size = 0x4, scoped, tag = 'scoped memory for tpu_custom_call.1']
    %7 = vsyncpa [#allocation3], 0
    // Predicated region
    $region2: #{tpu_custom_call.1} parent=1 // pred_check
      _
    $region3: #{tpu_custom_call.1} parent=1 // pred_check_branch
      %9 = sbr.rel (0) target = $region5
    $region4: #{tpu_custom_call.1} parent=1 // pred_region
      _
    $region5: #{tpu_custom_call.1} parent=1 // pred_fallthru
      _
    // Predicated region
    $region6: #{tpu_custom_call.1} parent=1 // pred_check
      _
    $region7: #{tpu_custom_call.1} parent=1 // pred_check_branch
      %11 = sbr.rel (0) target = $region9
    $region8: #{tpu_custom_call.1} parent=1 // pred_region
      _
    $region9: #{tpu_custom_call.1} parent=1 // pred_fallthru
      _
    %v12 = vld [vmem:[%s0] sm:$0xff]
    %v13 = vld [vmem:[%s1] sm:$0xff]
    %15 = vrot.lane.b32.xlu0 %v13, 32
    %v16 = vpop.permute.xlu0 %15
    %vm18 = vcmask 261120
    %v19 = vsel %vm18, %v13, %v16
    %v20 = vadd.f32 %v12, %v19
    %vm21 = vcmask 523264
    %22 = vst.msk [vmem:[#allocation2] sm:$0xff] %vm21, %v20
    // Predicated region
    $region10: #{tpu_custom_call.1} parent=1 // pred_check
      _
    $region11: #{tpu_custom_call.1} parent=1 // pred_check_branch
      %24 = sbr.rel (0) target = $region13
    $region12: #{tpu_custom_call.1} parent=1 // pred_region
      %s26 = ssub.s32 128, 128
      %27 = vsyncadd [#allocation3], %s26
      %s29 = sshll.u32 [#allocation2], 4
      %s30 = int_to_ptr.vmem [resolvable:$true] %s29
      %32 = dma.vmem_to_hbm [thread:$0]  %s30, 128, %s2, [#allocation3]
    $region13: #{tpu_custom_call.1} parent=1 // pred_fallthru
      _
    // Predicated region
    $region14: #{tpu_custom_call.1} parent=1 // pred_check
      _
    $region15: #{tpu_custom_call.1} parent=1 // pred_check_branch
      %34 = sbr.rel (0) target = $region17
    $region16: #{tpu_custom_call.1} parent=1 // pred_region
      %35 = dma.done [#allocation3], 128
    $region17: #{tpu_custom_call.1} parent=1 // pred_fallthru
      _
    %36 = vsyncpa [#allocation3], 1

</llo_original>
